<compile_context>
chip_gen: v5e
topology: v5e:2x2
jax: 0.10.0
libtpu: 0.0.40
codegen_flags: <defaults>
</compile_context>

<pallas_src>
import functools

import jax
import jax.numpy as jnp
from jax.experimental import pallas as pl
from jax.experimental.pallas import tpu as pltpu

ALPHA = 0.8
GAMMA = 2

LANES = 128
MAX_BLOCK_ROWS = 512          # (512, 128) f32 tile = 256 KiB per input per buffer


def _round_up(n, m):
    return (n + m - 1) // m * m


def _bce_elementwise(x, t):
    # Faithful to F.sigmoid + F.binary_cross_entropy: compute p explicitly and
    # clamp both logs at -100.  A logits/softplus rewrite would halve the EUP
    # transcendental count (v7x relief) but changes tail behaviour for
    # |x| >~ 17 vs. the clamp-at--100 reference semantics, so we keep this form.
    p = jax.nn.sigmoid(x)
    log_p = jnp.maximum(jnp.log(p), -100.0)
    log_1mp = jnp.maximum(jnp.log(1.0 - p), -100.0)
    return -(t * log_p + (1.0 - t) * log_1mp)


def _partial_sums(bce, block_rows):
    # (block_rows, 128) -> (8, 128): pure VPU adds over the leading axis; the
    # only cross-lane (XLU) reduction happens once, outside the kernel.
    return jnp.sum(bce.reshape(block_rows // 8, 8, LANES), axis=0)


def _focal_sum_kernel(x_ref, t_ref, o_ref, *, rows, block_rows, bpc):
    c = pl.program_id(0)          # "parallel" chunk axis (megacore on v7x)
    j = pl.program_id(1)          # "arbitrary" reduction axis

    @pl.when(j == 0)
    def _():
        o_ref[...] = jnp.zeros_like(o_ref)

    is_boundary = jnp.logical_and(c == pl.num_programs(0) - 1, j == bpc - 1)

    # Hot path: full tiles, no masking at all.
    @pl.when(jnp.logical_not(is_boundary))
    def _():
        bce = _bce_elementwise(x_ref[...].astype(jnp.float32),
                               t_ref[...].astype(jnp.float32))
        o_ref[...] += _partial_sums(bce, block_rows)

    # Boundary tile: rows past the true extent hold unspecified data -> mask.
    @pl.when(is_boundary)
    def _():
        bce = _bce_elementwise(x_ref[...].astype(jnp.float32),
                               t_ref[...].astype(jnp.float32))
        g = c * bpc + j
        row = jax.lax.broadcasted_iota(jnp.int32, (block_rows, LANES), 0)
        bce = jnp.where(g * block_rows + row < rows, bce, 0.0)
        o_ref[...] += _partial_sums(bce, block_rows)


def _as_float(a):
    # Keep float dtypes (f32 / bf16 / f16) as-is to avoid extra HBM traffic;
    # only non-float (bool/int) targets are promoted.
    return a if jnp.issubdtype(a.dtype, jnp.floating) else a.astype(jnp.float32)


def focal_loss(inputs, targets, alpha=ALPHA, gamma=GAMMA, smooth=1):
    # `smooth` is unused in the reference forward; kept for signature parity.
    total = inputs.size
    x = _as_float(inputs).reshape(-1)
    t = _as_float(targets).reshape(-1)

    # Pad (rarely) to the next 128-lane boundary only.  Pad values contribute
    # exactly 0 BCE (sigmoid(very negative) = 0, t = 0), so the hot loop never
    # needs a per-element mask for them.
    lane_pad = (-total) % LANES
    if lane_pad:
        x = jnp.pad(x, (0, lane_pad), constant_values=-1e9)
        t = jnp.pad(t, (0, lane_pad), constant_values=0)

    rows = (total + lane_pad) // LANES
    block_rows = min(MAX_BLOCK_ROWS, _round_up(rows, 8))
    n_blocks = pl.cdiv(rows, block_rows)

    # Split the row range into two chunks ("parallel" axis) so v7x's two
    # TensorCores both get work; only when the split is exact (no dead blocks).
    n_chunks = 2 if (n_blocks >= 2 and n_blocks % 2 == 0) else 1
    bpc = n_blocks // n_chunks

    x2 = x.reshape(rows, LANES)
    t2 = t.reshape(rows, LANES)

    kernel = functools.partial(
        _focal_sum_kernel, rows=rows, block_rows=block_rows, bpc=bpc)

    # VMEM budget: 2 inputs x 2 pipeline buffers x tile plus headroom for the
    # elementwise temporaries.  Kept >= 16 MiB (v5e scoped default) and
    # <= 32 MiB (safe on v7x's 64 MiB physical VMEM).
    tile_bytes = block_rows * LANES * (x2.dtype.itemsize + t2.dtype.itemsize)
    vmem_limit = int(min(max(2 * tile_bytes + (8 << 20), 16 << 20), 32 << 20))

    partials = pl.pallas_call(
        kernel,
        out_shape=jax.ShapeDtypeStruct((n_chunks, 8, LANES), jnp.float32),
        grid_spec=pltpu.PrefetchScalarGridSpec(
            num_scalar_prefetch=0,
            grid=(n_chunks, bpc),
            in_specs=[
                pl.BlockSpec((block_rows, LANES), lambda c, j: (c * bpc + j, 0)),
                pl.BlockSpec((block_rows, LANES), lambda c, j: (c * bpc + j, 0)),
            ],
            out_specs=pl.BlockSpec((None, 8, LANES), lambda c, j: (c, 0, 0)),
        ),
        compiler_params=pltpu.CompilerParams(
            dimension_semantics=("parallel", "arbitrary"),
            vmem_limit_bytes=vmem_limit,
        ),
    )(x2, t2)

    # Tiny scalar epilogue: one cross-lane reduce + the focal transform.
    # (total == 0 yields NaN, matching torch's mean over an empty tensor.)
    mean_bce = jnp.sum(partials) / jnp.float32(total)
    g = int(gamma) if float(gamma) == int(gamma) else float(gamma)
    return jnp.float32(alpha) * (1.0 - jnp.exp(-mean_bce)) ** g * mean_bce


def focal_loss_ref(inputs, targets, alpha=ALPHA, gamma=GAMMA):
    p = jax.nn.sigmoid(inputs.reshape(-1).astype(jnp.float32))
    t = targets.reshape(-1).astype(jnp.float32)
    bce = -(t * jnp.maximum(jnp.log(p), -100.0)
            + (1.0 - t) * jnp.maximum(jnp.log(1.0 - p), -100.0))
    bce = jnp.mean(bce)
    return alpha * (1.0 - jnp.exp(-bce)) ** gamma * bce


if __name__ == "__main__":
    key = jax.random.PRNGKey(0)
    k1, k2 = jax.random.split(key)
    # NCHW logits, matching a typical segmentation head output
    x = jax.random.normal(k1, (2, 4, 16, 16), dtype=jnp.float32)
    t = (jax.random.uniform(k2, (2, 4, 16, 16)) > 0.5).astype(jnp.float32)

    out = jax.block_until_ready(focal_loss(x, t))
    ref = jax.block_until_ready(focal_loss_ref(x, t))
    assert jnp.allclose(out, ref, rtol=1e-5, atol=1e-6), (out, ref)
    print("KERNEL_OK")
</pallas_src>

<mosaic_0001>
module attributes {stable_mosaic.version = 11 : i64} {
  func.func @_focal_sum_kernel(%arg0: i32, %arg1: i32, %arg2: memref<16x128xf32, #tpu.memory_space<vmem>>, %arg3: memref<16x128xf32, #tpu.memory_space<vmem>>, %arg4: memref<1x8x128xf32, #tpu.memory_space<vmem>>) attributes {dimension_semantics = [#tpu.dimension_semantics<parallel>, #tpu.dimension_semantics<arbitrary>], iteration_bounds = array<i64: 1, 1>, scalar_prefetch = 0 : i64, scratch_operands = 0 : i64, tpu.core_type = #tpu.core_type<tc>, window_params = [{transform_indices = @transform_0, window_bounds = array<i64: 16, 128>}, {transform_indices = @transform_1, window_bounds = array<i64: 16, 128>}, {transform_indices = @transform_2, window_bounds = array<i64: 1, 8, 128>}]} {
    %c0_i32 = arith.constant 0 : i32
    %0 = arith.cmpi eq, %arg1, %c0_i32 : i32
    %1 = arith.extui %0 : i1 to i32
    %c0_i32_0 = arith.constant 0 : i32
    %2 = arith.cmpi ne, %1, %c0_i32_0 : i32
    scf.if %2 {
      %cst = arith.constant 0.000000e+00 : f32
      %11 = vector.broadcast %cst : f32 to vector<8x128xf32>
      %c0 = arith.constant 0 : index
      %c0_5 = arith.constant 0 : index
      %c0_6 = arith.constant 0 : index
      %12 = vector.load %arg4[%c0, %c0_5, %c0_6] : memref<1x8x128xf32, #tpu.memory_space<vmem>>, vector<1x8x128xf32>
      %13 = vector.shape_cast %12 : vector<1x8x128xf32> to vector<8x128xf32>
      %14 = vector.shape_cast %11 : vector<8x128xf32> to vector<1x8x128xf32>
      tpu.vector_store %arg4[%c0, %c0_5, %c0_6], %14 {strides = array<i32>} : memref<1x8x128xf32, #tpu.memory_space<vmem>>, vector<1x8x128xf32>,
    } else {
    }
    %c0_i32_1 = arith.constant 0 : i32
    %3 = arith.cmpi eq, %arg0, %c0_i32_1 : i32
    %c0_i32_2 = arith.constant 0 : i32
    %4 = arith.cmpi eq, %arg1, %c0_i32_2 : i32
    %5 = arith.andi %3, %4 : i1
    %true = arith.constant true
    %6 = arith.xori %5, %true : i1
    %7 = arith.extui %6 : i1 to i32
    %c0_i32_3 = arith.constant 0 : i32
    %8 = arith.cmpi ne, %7, %c0_i32_3 : i32
    scf.if %8 {
      %c0 = arith.constant 0 : index
      %c0_5 = arith.constant 0 : index
      %11 = vector.load %arg2[%c0, %c0_5] : memref<16x128xf32, #tpu.memory_space<vmem>>, vector<16x128xf32>
      %c0_6 = arith.constant 0 : index
      %c0_7 = arith.constant 0 : index
      %12 = vector.load %arg3[%c0_6, %c0_7] : memref<16x128xf32, #tpu.memory_space<vmem>>, vector<16x128xf32>
      %13 = arith.negf %11 : vector<16x128xf32>
      %14 = math.exp %13 : vector<16x128xf32>
      %cst = arith.constant 1.000000e+00 : f32
      %15 = vector.broadcast %cst : f32 to vector<16x128xf32>
      %16 = arith.addf %15, %14 : vector<16x128xf32>
      %17 = arith.divf %15, %16 : vector<16x128xf32>
      %18 = math.log %17 : vector<16x128xf32>
      %cst_8 = arith.constant -1.000000e+02 : f32
      %19 = vector.broadcast %cst_8 : f32 to vector<16x128xf32>
      %20 = arith.maximumf %18, %19 : vector<16x128xf32>
      %cst_9 = arith.constant 1.000000e+00 : f32
      %21 = vector.broadcast %cst_9 : f32 to vector<16x128xf32>
      %22 = arith.subf %21, %17 : vector<16x128xf32>
      %23 = math.log %22 : vector<16x128xf32>
      %cst_10 = arith.constant -1.000000e+02 : f32
      %24 = vector.broadcast %cst_10 : f32 to vector<16x128xf32>
      %25 = arith.maximumf %23, %24 : vector<16x128xf32>
      %26 = arith.mulf %12, %20 : vector<16x128xf32>
      %cst_11 = arith.constant 1.000000e+00 : f32
      %27 = vector.broadcast %cst_11 : f32 to vector<16x128xf32>
      %28 = arith.subf %27, %12 : vector<16x128xf32>
      %29 = arith.mulf %28, %25 : vector<16x128xf32>
      %30 = arith.addf %26, %29 : vector<16x128xf32>
      %cst_12 = arith.constant 0.000000e+00 : f32
      %31 = vector.broadcast %cst_12 : f32 to vector<16x128xf32>
      %32 = arith.subf %31, %30 : vector<16x128xf32>
      %c0_13 = arith.constant 0 : index
      %c0_14 = arith.constant 0 : index
      %c0_15 = arith.constant 0 : index
      %33 = vector.load %arg4[%c0_13, %c0_14, %c0_15] : memref<1x8x128xf32, #tpu.memory_space<vmem>>, vector<1x8x128xf32>
      %34 = vector.shape_cast %33 : vector<1x8x128xf32> to vector<8x128xf32>
      %35 = vector.shape_cast %32 : vector<16x128xf32> to vector<2x8x128xf32>
      %cst_16 = arith.constant dense<0.000000e+00> : vector<8x128xf32>
      %36 = vector.multi_reduction <add>, %35, %cst_16 [0] : vector<2x8x128xf32> to vector<8x128xf32>
      %37 = arith.addf %34, %36 : vector<8x128xf32>
      %c0_17 = arith.constant 0 : index
      %c0_18 = arith.constant 0 : index
      %c0_19 = arith.constant 0 : index
      %38 = vector.load %arg4[%c0_17, %c0_18, %c0_19] : memref<1x8x128xf32, #tpu.memory_space<vmem>>, vector<1x8x128xf32>
      %39 = vector.shape_cast %38 : vector<1x8x128xf32> to vector<8x128xf32>
      %40 = vector.shape_cast %37 : vector<8x128xf32> to vector<1x8x128xf32>
      tpu.vector_store %arg4[%c0_17, %c0_18, %c0_19], %40 {strides = array<i32>} : memref<1x8x128xf32, #tpu.memory_space<vmem>>, vector<1x8x128xf32>,
    } else {
    }
    %9 = arith.extui %5 : i1 to i32
    %c0_i32_4 = arith.constant 0 : i32
    %10 = arith.cmpi ne, %9, %c0_i32_4 : i32
    scf.if %10 {
      %c0 = arith.constant 0 : index
      %c0_5 = arith.constant 0 : index
      %11 = vector.load %arg2[%c0, %c0_5] : memref<16x128xf32, #tpu.memory_space<vmem>>, vector<16x128xf32>
      %c0_6 = arith.constant 0 : index
      %c0_7 = arith.constant 0 : index
      %12 = vector.load %arg3[%c0_6, %c0_7] : memref<16x128xf32, #tpu.memory_space<vmem>>, vector<16x128xf32>
      %13 = arith.negf %11 : vector<16x128xf32>
      %14 = math.exp %13 : vector<16x128xf32>
      %cst = arith.constant 1.000000e+00 : f32
      %15 = vector.broadcast %cst : f32 to vector<16x128xf32>
      %16 = arith.addf %15, %14 : vector<16x128xf32>
      %17 = arith.divf %15, %16 : vector<16x128xf32>
      %18 = math.log %17 : vector<16x128xf32>
      %cst_8 = arith.constant -1.000000e+02 : f32
      %19 = vector.broadcast %cst_8 : f32 to vector<16x128xf32>
      %20 = arith.maximumf %18, %19 : vector<16x128xf32>
      %cst_9 = arith.constant 1.000000e+00 : f32
      %21 = vector.broadcast %cst_9 : f32 to vector<16x128xf32>
      %22 = arith.subf %21, %17 : vector<16x128xf32>
      %23 = math.log %22 : vector<16x128xf32>
      %cst_10 = arith.constant -1.000000e+02 : f32
      %24 = vector.broadcast %cst_10 : f32 to vector<16x128xf32>
      %25 = arith.maximumf %23, %24 : vector<16x128xf32>
      %26 = arith.mulf %12, %20 : vector<16x128xf32>
      %cst_11 = arith.constant 1.000000e+00 : f32
      %27 = vector.broadcast %cst_11 : f32 to vector<16x128xf32>
      %28 = arith.subf %27, %12 : vector<16x128xf32>
      %29 = arith.mulf %28, %25 : vector<16x128xf32>
      %30 = arith.addf %26, %29 : vector<16x128xf32>
      %cst_12 = arith.constant 0.000000e+00 : f32
      %31 = vector.broadcast %cst_12 : f32 to vector<16x128xf32>
      %32 = arith.subf %31, %30 : vector<16x128xf32>
      %c1_i32 = arith.constant 1 : i32
      %33 = arith.muli %arg0, %c1_i32 : i32
      %34 = arith.addi %33, %arg1 : i32
      %35 = tpu.iota {dimensions = array<i32: 0>} : vector<16x128xi32>
      %c16_i32 = arith.constant 16 : i32
      %36 = arith.muli %34, %c16_i32 : i32
      %37 = vector.broadcast %36 : i32 to vector<16x128xi32>
      %38 = arith.addi %37, %35 : vector<16x128xi32>
      %c16_i32_13 = arith.constant 16 : i32
      %39 = vector.broadcast %c16_i32_13 : i32 to vector<16x128xi32>
      %40 = arith.cmpi slt, %38, %39 : vector<16x128xi32>
      %cst_14 = arith.constant 0.000000e+00 : f32
      %41 = vector.broadcast %cst_14 : f32 to vector<16x128xf32>
      %42 = arith.select %40, %32, %41 : vector<16x128xi1>, vector<16x128xf32>
      %c0_15 = arith.constant 0 : index
      %c0_16 = arith.constant 0 : index
      %c0_17 = arith.constant 0 : index
      %43 = vector.load %arg4[%c0_15, %c0_16, %c0_17] : memref<1x8x128xf32, #tpu.memory_space<vmem>>, vector<1x8x128xf32>
      %44 = vector.shape_cast %43 : vector<1x8x128xf32> to vector<8x128xf32>
      %45 = vector.shape_cast %42 : vector<16x128xf32> to vector<2x8x128xf32>
      %cst_18 = arith.constant dense<0.000000e+00> : vector<8x128xf32>
      %46 = vector.multi_reduction <add>, %45, %cst_18 [0] : vector<2x8x128xf32> to vector<8x128xf32>
      %47 = arith.addf %44, %46 : vector<8x128xf32>
      %c0_19 = arith.constant 0 : index
      %c0_20 = arith.constant 0 : index
      %c0_21 = arith.constant 0 : index
      %48 = vector.load %arg4[%c0_19, %c0_20, %c0_21] : memref<1x8x128xf32, #tpu.memory_space<vmem>>, vector<1x8x128xf32>
      %49 = vector.shape_cast %48 : vector<1x8x128xf32> to vector<8x128xf32>
      %50 = vector.shape_cast %47 : vector<8x128xf32> to vector<1x8x128xf32>
      tpu.vector_store %arg4[%c0_19, %c0_20, %c0_21], %50 {strides = array<i32>} : memref<1x8x128xf32, #tpu.memory_space<vmem>>, vector<1x8x128xf32>,
    } else {
    }
    return
  }
  func.func @transform_0(%arg0: i32, %arg1: i32) -> (i32, i32) {
    %c1_i32 = arith.constant 1 : i32
    %0 = arith.muli %arg0, %c1_i32 : i32
    %1 = arith.addi %0, %arg1 : i32
    %c0_i32 = arith.constant 0 : i32
    %c0_i32_0 = arith.constant 0 : i32
    return %1, %c0_i32 : i32, i32
  }
  func.func @transform_1(%arg0: i32, %arg1: i32) -> (i32, i32) {
    %c1_i32 = arith.constant 1 : i32
    %0 = arith.muli %arg0, %c1_i32 : i32
    %1 = arith.addi %0, %arg1 : i32
    %c0_i32 = arith.constant 0 : i32
    %c0_i32_0 = arith.constant 0 : i32
    return %1, %c0_i32 : i32, i32
  }
  func.func @transform_2(%arg0: i32, %arg1: i32) -> (i32, i32, i32) {
    %c0_i32 = arith.constant 0 : i32
    %c0_i32_0 = arith.constant 0 : i32
    %c0_i32_1 = arith.constant 0 : i32
    return %arg0, %c0_i32, %c0_i32_0 : i32, i32, i32
  }
}

</mosaic_0001>

<llo_original>
// kernel: tpu_custom_call.1
$region0: #{tpu_custom_call.1}
  #allocation0 [shape = 'u32[]', space=smem, size = 0x4, offset = 0x4, fixed_abs, tag = 'smem constant byte address 0x4 - core index']
  #allocation1 [shape = 'u32[72,128]{1,0:T(1,128)}', space=vmem, size = 0x9000, scoped, tag = 'internal scratch']
  %s0 = inlined_call_operand.hbm [shape: f32[16,128], index: 0, kind: input, shape index: {}]
  %s1 = inlined_call_operand.hbm [shape: f32[16,128], index: 1, kind: input, shape index: {}]
  %s2 = inlined_call_operand.hbm [shape: f32[1,8,128], index: 2, kind: output, shape index: {}]
  %s3 = sld [smem:[#allocation0]]
  $region38: #{tpu_custom_call.1} parent=0
    _
  %s5 = ssub.s32 1, %s3
  %s6 = scalar_select 0, %s5, %s3
  $region1: #{tpu_custom_call.1} parent=0
    #allocation2 [shape = 'u8[8192]{0}', space=vmem, size = 0x2000, scoped, tag = 'input window, operand 0, single buffered']
    #allocation3 [shape = 's32[1]{0}', space=sflag, size = 0x4, scoped, tag = 'scoped memory for tpu_custom_call.1']
    #allocation4 [shape = 's32[1]{0}', space=sflag, size = 0x4, scoped, tag = 'scoped memory for tpu_custom_call.1']
    #allocation5 [shape = 'u8[8192]{0}', space=vmem, size = 0x2000, scoped, tag = 'input window, operand 1, single buffered']
    #allocation6 [shape = 's32[1]{0}', space=sflag, size = 0x4, scoped, tag = 'scoped memory for tpu_custom_call.1']
    #allocation7 [shape = 'u8[4096]{0}', space=vmem, size = 0x1000, scoped, tag = 'output window, operand 0, single buffered']
    %7 = vsyncpa [#allocation3], 0
    %8 = vsyncpa [#allocation6], 0
    %9 = vsyncpa [#allocation4], 0
    // Predicated region
    $region2: #{tpu_custom_call.1} parent=1 // pred_check
      _
    $region3: #{tpu_custom_call.1} parent=1 // pred_check_branch
      %11 = sbr.rel (0) target = $region5
    $region4: #{tpu_custom_call.1} parent=1 // pred_region
      %s12 = sadd.s32 0, 0
      %s13 = smul.u32 2, %s12
      %15 = vsyncadd [#allocation3], 0
      %s16 = smul.addr %s13, 8
      %s17 = scalar_lea.hbm %s0, %s16
      %s18 = sshll.u32 %s17, 4
      %s19 = int_to_ptr.hbm [resolvable:$true] %s18
      %s20 = sshll.u32 [#allocation2], 4
      %s21 = int_to_ptr.vmem [resolvable:$true] %s20
      %26 = dma.hbm_to_vmem [thread:$0]  %s19, 256, %s21, [#allocation3], 128, 128, 8
    $region5: #{tpu_custom_call.1} parent=1 // pred_fallthru
      _
    // Predicated region
    $region6: #{tpu_custom_call.1} parent=1 // pred_check
      _
    $region7: #{tpu_custom_call.1} parent=1 // pred_check_branch
      %28 = sbr.rel (0) target = $region9
    $region8: #{tpu_custom_call.1} parent=1 // pred_region
      %s29 = sadd.s32 0, 0
      %s30 = smul.u32 2, %s29
      %32 = vsyncadd [#allocation6], 0
      %s33 = smul.addr %s30, 8
      %s34 = scalar_lea.hbm %s1, %s33
      %s35 = sshll.u32 %s34, 4
      %s36 = int_to_ptr.hbm [resolvable:$true] %s35
      %s37 = sshll.u32 [#allocation5], 4
      %s38 = int_to_ptr.vmem [resolvable:$true] %s37
      %43 = dma.hbm_to_vmem [thread:$0]  %s36, 256, %s38, [#allocation6], 128, 128, 8
    $region9: #{tpu_custom_call.1} parent=1 // pred_fallthru
      _
    // Predicated region
    $region10: #{tpu_custom_call.1} parent=1 // pred_check
      _
    $region11: #{tpu_custom_call.1} parent=1 // pred_check_branch
      %45 = sbr.rel (0) target = $region13
    $region12: #{tpu_custom_call.1} parent=1 // pred_region
      %47 = dma.done [#allocation3], 256
    $region13: #{tpu_custom_call.1} parent=1 // pred_fallthru
      _
    // Predicated region
    $region14: #{tpu_custom_call.1} parent=1 // pred_check
      _
    $region15: #{tpu_custom_call.1} parent=1 // pred_check_branch
      %49 = sbr.rel (0) target = $region17
    $region16: #{tpu_custom_call.1} parent=1 // pred_region
      %51 = dma.done [#allocation6], 256
    $region17: #{tpu_custom_call.1} parent=1 // pred_fallthru
      _
    %s52 = sadd.s32 0, 0
    %s53 = smul.u32 2, %s52
    %s54 = sadd.s32 0, 0
    %s55 = smul.u32 2, %s54
    %p56 = scmp.eq.s32.totalorder 0, 0
    // Predicated region
    $region18: #{tpu_custom_call.1} parent=1 // pred_check
      %p57 = pneg %p56
    $region19: #{tpu_custom_call.1} parent=1 // pred_check_branch
      %59 = sbr.rel (%p57) target = $region21
    $region20: #{tpu_custom_call.1} parent=1 // pred_region
      %60 = vst [vmem:[#allocation7] sm:$0xff] 0.0
    $region21: #{tpu_custom_call.1} parent=1 // pred_fallthru
      _
    %p61 = scmp.eq.s32.totalorder 0, 0
    %p62 = pnand %p61, %p56
    %p63 = pneg %p62
    // Predicated region
    $region22: #{tpu_custom_call.1} parent=1 // pred_check
      _
    $region23: #{tpu_custom_call.1} parent=1 // pred_check_branch
      %65 = sbr.rel (%p62) target = $region25
    $region24: #{tpu_custom_call.1} parent=1 // pred_region
      %v66 = vld [vmem:[#allocation2] sm:$0xff]
      %v67 = vld [vmem:[#allocation2 + $0x8] sm:$0xff]
      %v68 = vld [vmem:[#allocation5] sm:$0xff]
      %v69 = vld [vmem:[#allocation5 + $0x8] sm:$0xff]
      %v70 = vxor.u32 %v66, 2147483648
      %v71 = vxor.u32 %v67, 2147483648
      %v72 = vmul.f32 %v70, 1.442695
      %v73 = vpow.pop %v72
      %v74 = vmul.f32 %v71, 1.442695
      %v75 = vpow.pop %v74
      %v76 = vadd.f32 %v73, 1.0
      %v77 = vadd.f32 %v75, 1.0
      %v78 = vrcp.pop %v76
      %v79 = vmul.f32 %v76, %v78
      %v80 = vsub.f32 1.0, %v79
      %v81 = vmul.f32 %v78, %v80
      %v82 = vadd.f32 %v78, %v81
      %vm83 = vweird.f32 %v76
      %vm84 = vweird.f32 %v78
      %vm85 = vmor %vm83, %vm84
      %v86 = vsel %vm85, %v78, %v82
      %v87 = vand.u32 2147483647, %v76
      %vm88 = vcmp.eq.f32.partialorder %v87, 8.507059e+37
      %v89 = vand.u32 %v76, 2147483648
      %v90 = vor.u32 1.1754944e-38, %v89
      %v91 = vsel %vm88, %v90, %v86
      %v92 = vmul.f32 1.0, %v91
      %v93 = vrcp.pop %v77
      %v94 = vmul.f32 %v77, %v93
      %v95 = vsub.f32 1.0, %v94
      %v96 = vmul.f32 %v93, %v95
      %v97 = vadd.f32 %v93, %v96
      %vm98 = vweird.f32 %v77
      %vm99 = vweird.f32 %v93
      %vm100 = vmor %vm98, %vm99
      %v101 = vsel %vm100, %v93, %v97
      %v102 = vand.u32 2147483647, %v77
      %vm103 = vcmp.eq.f32.partialorder %v102, 8.507059e+37
      %v104 = vand.u32 %v77, 2147483648
      %v105 = vor.u32 1.1754944e-38, %v104
      %v106 = vsel %vm103, %v105, %v101
      %v107 = vmul.f32 1.0, %v106
      %v108 = vlog2.pop %v92
      %v109 = vmul.f32 %v108, 0.6931472
      %v110 = vlog2.pop %v107
      %v111 = vmul.f32 %v110, 0.6931472
      %v112 = vmax.f32 %v109, -100.0
      %v113 = vmax.f32 %v111, -100.0
      %v114 = vsub.f32 1.0, %v92
      %v115 = vsub.f32 1.0, %v107
      %v116 = vlog2.pop %v114
      %v117 = vmul.f32 %v116, 0.6931472
      %v118 = vlog2.pop %v115
      %v119 = vmul.f32 %v118, 0.6931472
      %v120 = vmax.f32 %v117, -100.0
      %v121 = vmax.f32 %v119, -100.0
      %v122 = vmul.f32 %v68, %v112
      %v123 = vmul.f32 %v69, %v113
      %v124 = vsub.f32 1.0, %v68
      %v125 = vsub.f32 1.0, %v69
      %v126 = vmul.f32 %v124, %v120
      %v127 = vmul.f32 %v125, %v121
      %v128 = vadd.f32 %v122, %v126
      %v129 = vadd.f32 %v123, %v127
      %v130 = vsub.f32 0.0, %v128
      %v131 = vsub.f32 0.0, %v129
      %s132 = sadd.s32 0, 0
      %v133 = vlaneseq
      %v134 = vshrl.u32 %v133, 7
      %v135 = vadd.s32 %v134, 8
      %s136 = smul.u32 %s132, 16
      %v137 = vstv %s136
      %v138 = vadd.s32 %v137, %v134
      %v139 = vadd.s32 %v137, %v135
      %vm140 = vcmp.lt.s32.totalorder %v138, 16
      %vm141 = vcmp.lt.s32.totalorder %v139, 16
      %v142 = vsel %vm140, %v130, 0.0
      %v143 = vsel %vm141, %v131, 0.0
      %v144 = vld [vmem:[#allocation7] sm:$0xff]
      %v145 = vadd.f32 %v142, %v143
      %v146 = vadd.f32 %v144, %v145
      %147 = vst [vmem:[#allocation7] sm:$0xff] %v146
    $region25: #{tpu_custom_call.1} parent=1 // pred_fallthru
      _
    // Predicated region
    $region26: #{tpu_custom_call.1} parent=1 // pred_check
      %p148 = pneg %p62
    $region27: #{tpu_custom_call.1} parent=1 // pred_check_branch
      %150 = sbr.rel (%p148) target = $region29
    $region28: #{tpu_custom_call.1} parent=1 // pred_region
      %v151 = vld [vmem:[#allocation2] sm:$0xff]
      %v152 = vld [vmem:[#allocation2 + $0x8] sm:$0xff]
      %v153 = vld [vmem:[#allocation5] sm:$0xff]
      %v154 = vld [vmem:[#allocation5 + $0x8] sm:$0xff]
      %v155 = vxor.u32 %v151, 2147483648
      %v156 = vxor.u32 %v152, 2147483648
      %v157 = vmul.f32 %v155, 1.442695
      %v158 = vpow.pop %v157
      %v159 = vmul.f32 %v156, 1.442695
      %v160 = vpow.pop %v159
      %v161 = vadd.f32 %v158, 1.0
      %v162 = vadd.f32 %v160, 1.0
      %v163 = vrcp.pop %v161
      %v164 = vmul.f32 %v161, %v163
      %v165 = vsub.f32 1.0, %v164
      %v166 = vmul.f32 %v163, %v165
      %v167 = vadd.f32 %v163, %v166
      %vm168 = vweird.f32 %v161
      %vm169 = vweird.f32 %v163
      %vm170 = vmor %vm168, %vm169
      %v171 = vsel %vm170, %v163, %v167
      %v172 = vand.u32 2147483647, %v161
      %vm173 = vcmp.eq.f32.partialorder %v172, 8.507059e+37
      %v174 = vand.u32 %v161, 2147483648
      %v175 = vor.u32 1.1754944e-38, %v174
      %v176 = vsel %vm173, %v175, %v171
      %v177 = vmul.f32 1.0, %v176
      %v178 = vrcp.pop %v162
      %v179 = vmul.f32 %v162, %v178
      %v180 = vsub.f32 1.0, %v179
      %v181 = vmul.f32 %v178, %v180
      %v182 = vadd.f32 %v178, %v181
      %vm183 = vweird.f32 %v162
      %vm184 = vweird.f32 %v178
      %vm185 = vmor %vm183, %vm184
      %v186 = vsel %vm185, %v178, %v182
      %v187 = vand.u32 2147483647, %v162
      %vm188 = vcmp.eq.f32.partialorder %v187, 8.507059e+37
      %v189 = vand.u32 %v162, 2147483648
      %v190 = vor.u32 1.1754944e-38, %v189
      %v191 = vsel %vm188, %v190, %v186
      %v192 = vmul.f32 1.0, %v191
      %v193 = vlog2.pop %v177
      %v194 = vmul.f32 %v193, 0.6931472
      %v195 = vlog2.pop %v192
      %v196 = vmul.f32 %v195, 0.6931472
      %v197 = vmax.f32 %v194, -100.0
      %v198 = vmax.f32 %v196, -100.0
      %v199 = vsub.f32 1.0, %v177
      %v200 = vsub.f32 1.0, %v192
      %v201 = vlog2.pop %v199
      %v202 = vmul.f32 %v201, 0.6931472
      %v203 = vlog2.pop %v200
      %v204 = vmul.f32 %v203, 0.6931472
      %v205 = vmax.f32 %v202, -100.0
      %v206 = vmax.f32 %v204, -100.0
      %v207 = vmul.f32 %v153, %v197
      %v208 = vmul.f32 %v154, %v198
      %v209 = vsub.f32 1.0, %v153
      %v210 = vsub.f32 1.0, %v154
      %v211 = vmul.f32 %v209, %v205
      %v212 = vmul.f32 %v210, %v206
      %v213 = vadd.f32 %v207, %v211
      %v214 = vadd.f32 %v208, %v212
      %v215 = vsub.f32 0.0, %v213
      %v216 = vsub.f32 0.0, %v214
      %v217 = vld [vmem:[#allocation7] sm:$0xff]
      %v218 = vadd.f32 %v215, %v216
      %v219 = vadd.f32 %v217, %v218
      %220 = vst [vmem:[#allocation7] sm:$0xff] %v219
    $region29: #{tpu_custom_call.1} parent=1 // pred_fallthru
      _
    // Predicated region
    $region30: #{tpu_custom_call.1} parent=1 // pred_check
      _
    $region31: #{tpu_custom_call.1} parent=1 // pred_check_branch
      %222 = sbr.rel (0) target = $region33
    $region32: #{tpu_custom_call.1} parent=1 // pred_region
      %224 = vsyncadd [#allocation4], 0
      %s226 = sshll.u32 [#allocation7], 4
      %s227 = int_to_ptr.vmem [resolvable:$true] %s226
      %s228 = sshll.u32 %s2, 4
      %s229 = int_to_ptr.hbm [resolvable:$true] %s228
      %231 = dma.vmem_to_hbm [thread:$0]  %s227, 128, %s229, [#allocation4]
    $region33: #{tpu_custom_call.1} parent=1 // pred_fallthru
      _
    // Predicated region
    $region34: #{tpu_custom_call.1} parent=1 // pred_check
      _
    $region35: #{tpu_custom_call.1} parent=1 // pred_check_branch
      %233 = sbr.rel (0) target = $region37
    $region36: #{tpu_custom_call.1} parent=1 // pred_region
      %235 = dma.done [#allocation4], 128
    $region37: #{tpu_custom_call.1} parent=1 // pred_fallthru
      _
    %236 = vsyncpa [#allocation3], 1
    %237 = vsyncpa [#allocation6], 1
    %238 = vsyncpa [#allocation4], 1

</llo_original>
